<compile_context>
chip_gen: v5e
topology: v5e:2x2
jax: 0.10.0
libtpu: 0.0.40
codegen_flags: <defaults>
</compile_context>

<pallas_src>
import math

import jax
import jax.numpy as jnp
from jax import lax
from jax.experimental import pallas as pl
from jax.experimental.pallas import tpu as pltpu


# ---------------------------------------------------------------------------
# Pallas kernel: fused  (x @ W1 + b1) -> ReLU -> (W2 @ .T + b2) -> Tanh
# ---------------------------------------------------------------------------
def _ellipse_regressor_kernel(x_ref, w1_ref, b1_ref, w2t_ref, b2t_ref, o_ref):
    # First Linear + ReLU: bf16 inputs, f32 accumulate on the MXU; bias/ReLU on VPU.
    h = jnp.dot(x_ref[...], w1_ref[...], preferred_element_type=jnp.float32)
    h = jnp.maximum(h + b1_ref[...], 0.0)                       # (TM, Hp) f32
    # Second Linear, produced directly in transposed (out, TM) orientation:
    #   yt[o, m] = sum_h w2t[o, h] * h[m, h]   (contract both last dims -> no data transpose)
    yt = lax.dot_general(
        w2t_ref[...], h,
        dimension_numbers=(((1,), (1,)), ((), ())),
        preferred_element_type=jnp.float32)                     # (8, TM) f32
    yt = jnp.tanh(yt + b2t_ref[...])                            # tanh on EUP; pad rows are tanh(0)=0
    o_ref[...] = yt[:3, :]                                      # lane-dense (3, TM) store


# ---------------------------------------------------------------------------
# Wrapper-side helpers
# ---------------------------------------------------------------------------
def _round_up(v, m):
    return ((v + m - 1) // m) * m


def _cdiv(a, b):
    return -(-a // b)


def prepare_ellipse_regressor_params(w1, b1, w2, b2):
    """Pad / transpose / cast the tiny weight operands once (hoisted out of forward).

    w1 : (in_channels, hidden)   b1 : (hidden,)
    w2 : (hidden, 3)             b2 : (3,)
    Zero pads keep results exact: ReLU(0 + 0) = 0 and zero w2 rows/cols contribute nothing.
    """
    c, hdim = w1.shape
    hpad = _round_up(max(hdim, 128), 128)
    op = 8  # second-layer outputs padded 3 -> 8 sublanes

    w1_p = jnp.zeros((c, hpad), jnp.bfloat16).at[:, :hdim].set(w1.astype(jnp.bfloat16))
    b1_p = jnp.zeros((1, hpad), jnp.float32).at[0, :hdim].set(b1.astype(jnp.float32))
    w2t_p = jnp.zeros((op, hpad), jnp.float32).at[:3, :hdim].set(
        w2.astype(jnp.float32).T)
    b2t_p = jnp.zeros((op, 1), jnp.float32).at[:3, 0].set(b2.astype(jnp.float32))
    return w1_p, b1_p, w2t_p, b2t_p


def _choose_tile(n, c, tm_max, vmem_budget_bytes=20 << 20):
    """Pick a batch tile size from a VMEM byte budget + megacore/ragged balancing."""
    row_bytes = c * 2                                   # bf16 x row
    tm_cap = (vmem_budget_bytes // (2 * row_bytes)) // 128 * 128  # double-buffered
    tm_cap = max(128, min(tm_cap, tm_max))
    if n < 256:
        return n, 1                                     # single tile (block == full array)
    num_tiles = _cdiv(n, tm_cap)
    if num_tiles % 2 == 1:
        num_tiles += 1                                  # even step count -> both v7x TCs get work
    tm = _round_up(_cdiv(n, num_tiles), 128)            # balanced tiles, lane-dense out block
    return tm, _cdiv(n, tm)


def ellipse_regressor_forward(x, params, *, tm_max=1024):
    """Run the EllipseRegressor forward pass.

    x      : (N, C, Hs, Ws) or (N, in_channels)
    params : output of prepare_ellipse_regressor_params
    Returns (d_a, d_b, d_theta), each of shape (N,).
    """
    w1_p, b1_p, w2t_p, b2t_p = params
    n = x.shape[0]
    # flatten(start_dim=1) + bf16 streaming of the HBM-dominant operand.
    x2 = x.reshape(n, -1).astype(jnp.bfloat16)
    c = x2.shape[1]
    hpad = w1_p.shape[1]
    op = w2t_p.shape[0]
    assert w1_p.shape[0] == c, "in_channels mismatch between x and prepared params"

    tm, n_tiles = _choose_tile(n, c, tm_max)

    # Explicit VMEM limit: double-buffered x tile + resident weights + out tile, with headroom.
    x_bytes = 2 * tm * c * 2
    w_bytes = c * hpad * 2 + hpad * 4 + op * hpad * 4 + op * 4
    out_bytes = 2 * 3 * max(tm, 128) * 4
    vmem_limit = int((x_bytes + w_bytes + out_bytes) * 1.5) + (2 << 20)
    vmem_limit = max(16 << 20, min(vmem_limit, 48 << 20))

    # Advisory cost hint so XLA schedules around this (HBM-bound) custom call sensibly.
    cost = pl.CostEstimate(
        flops=2 * n * (c * hpad + op * hpad),
        transcendentals=n * op,
        bytes_accessed=(n * c * 2 + c * hpad * 2 + hpad * 4
                        + op * hpad * 4 + op * 4 + 3 * n * 4),
    )

    out = pl.pallas_call(
        _ellipse_regressor_kernel,
        out_shape=jax.ShapeDtypeStruct((3, n), jnp.float32),
        grid=(n_tiles,),
        in_specs=[
            # x streamed tile-by-tile over the batch; Pallas double-buffers the DMA.
            pl.BlockSpec((tm, c), lambda i: (i, 0)),
            # Weights/biases: same block every iteration -> VMEM-resident.
            pl.BlockSpec((c, hpad), lambda i: (0, 0)),
            pl.BlockSpec((1, hpad), lambda i: (0, 0)),
            pl.BlockSpec((op, hpad), lambda i: (0, 0)),
            pl.BlockSpec((op, 1), lambda i: (0, 0)),
        ],
        # Transposed, lane-dense output: only 3*N f32 of writeback, no padded lanes.
        out_specs=pl.BlockSpec((3, tm), lambda i: (0, i)),
        compiler_params=pltpu.CompilerParams(
            dimension_semantics=("parallel",),          # v7x: shard batch across both TCs
            vmem_limit_bytes=vmem_limit),
        cost_estimate=cost,
    )(x2, w1_p, b1_p, w2t_p, b2t_p)

    # unbind(dim=-1) of the PyTorch output == row views of the transposed result.
    d_a, d_b, d_theta = out[0], out[1], out[2]
    return d_a, d_b, d_theta


# ---------------------------------------------------------------------------
# Deterministic parameter init (matches nn.init.xavier_uniform_(gain=0.01),
# zero biases) and a small NCHW input, as in the PyTorch module.
# ---------------------------------------------------------------------------
def _xavier_uniform(key, fan_in, fan_out, gain):
    bound = gain * math.sqrt(6.0 / (fan_in + fan_out))
    # stored as (in, out) = transpose of PyTorch's (out, in) weight layout
    return jax.random.uniform(key, (fan_in, fan_out), jnp.float32, -bound, bound)


def _reference_forward(x, w1, b1, w2, b2):
    x2 = x.reshape(x.shape[0], -1).astype(jnp.float32)
    h = jnp.maximum(x2 @ w1 + b1, 0.0)
    y = jnp.tanh(h @ w2 + b2)
    return y[:, 0], y[:, 1], y[:, 2]


if __name__ == "__main__":
    key = jax.random.PRNGKey(0)
    k_x, k_w1, k_w2 = jax.random.split(key, 3)

    # Small shapes consistent with the module: flatten(2,4,16,16) -> in_channels=1024
    N, C, Hs, Ws = 2, 4, 16, 16
    in_channels = C * Hs * Ws          # 1024 (module default)
    hidden = 64                        # module default

    x = jax.random.normal(k_x, (N, C, Hs, Ws), jnp.float32)
    w1 = _xavier_uniform(k_w1, in_channels, hidden, gain=0.01)
    b1 = jnp.zeros((hidden,), jnp.float32)
    w2 = _xavier_uniform(k_w2, hidden, 3, gain=0.01)
    b2 = jnp.zeros((3,), jnp.float32)

    params = prepare_ellipse_regressor_params(w1, b1, w2, b2)   # padded once, reused per call
    d_a, d_b, d_theta = ellipse_regressor_forward(x, params)
    jax.block_until_ready((d_a, d_b, d_theta))

    # Correctness check against a pure-JAX f32 reference of the PyTorch forward.
    # Tolerance loosened vs. the f32-only version because x/w1 are streamed as bf16.
    ra, rb, rt = _reference_forward(x, w1, b1, w2, b2)
    assert d_a.shape == (N,) and d_b.shape == (N,) and d_theta.shape == (N,)
    assert jnp.allclose(d_a, ra, atol=5e-3, rtol=1e-2), "d_a mismatch"
    assert jnp.allclose(d_b, rb, atol=5e-3, rtol=1e-2), "d_b mismatch"
    assert jnp.allclose(d_theta, rt, atol=5e-3, rtol=1e-2), "d_theta mismatch"

    print("KERNEL_OK")
</pallas_src>

<mosaic_0001>
module attributes {stable_mosaic.version = 11 : i64} {
  func.func @_ellipse_regressor_kernel(%arg0: i32, %arg1: memref<2x1024xbf16, #tpu.memory_space<vmem>>, %arg2: memref<1024x128xbf16, #tpu.memory_space<vmem>>, %arg3: memref<1x128xf32, #tpu.memory_space<vmem>>, %arg4: memref<8x128xf32, #tpu.memory_space<vmem>>, %arg5: memref<8x1xf32, #tpu.memory_space<vmem>>, %arg6: memref<3x2xf32, #tpu.memory_space<vmem>>) attributes {dimension_semantics = [#tpu.dimension_semantics<parallel>], iteration_bounds = array<i64: 1>, scalar_prefetch = 0 : i64, scratch_operands = 0 : i64, tpu.core_type = #tpu.core_type<tc>, window_params = [{transform_indices = @transform_0, window_bounds = array<i64: 2, 1024>}, {pipeline_mode = #tpu.pipeline_mode<synchronous>, transform_indices = @transform_1, window_bounds = array<i64: 1024, 128>}, {pipeline_mode = #tpu.pipeline_mode<synchronous>, transform_indices = @transform_2, window_bounds = array<i64: 1, 128>}, {pipeline_mode = #tpu.pipeline_mode<synchronous>, transform_indices = @transform_3, window_bounds = array<i64: 8, 128>}, {pipeline_mode = #tpu.pipeline_mode<synchronous>, transform_indices = @transform_4, window_bounds = array<i64: 8, 1>}, {transform_indices = @transform_5, window_bounds = array<i64: 3, 2>}]} {
    %c0 = arith.constant 0 : index
    %c0_0 = arith.constant 0 : index
    %0 = vector.load %arg1[%c0, %c0_0] : memref<2x1024xbf16, #tpu.memory_space<vmem>>, vector<2x1024xbf16>
    %c0_1 = arith.constant 0 : index
    %c0_2 = arith.constant 0 : index
    %1 = vector.load %arg2[%c0_1, %c0_2] : memref<1024x128xbf16, #tpu.memory_space<vmem>>, vector<1024x128xbf16>
    %cst = arith.constant dense<0.000000e+00> : vector<2x128xf32>
    %2 = tpu.matmul %0, %1, %cst {dimension_numbers = #tpu.dot_dimension_numbers<[1], [0], [0], [1], [0, 0, 1, 1], [], []>} : vector<2x1024xbf16>, vector<1024x128xbf16>, vector<2x128xf32> -> vector<2x128xf32>
    %c0_3 = arith.constant 0 : index
    %c0_4 = arith.constant 0 : index
    %3 = vector.load %arg3[%c0_3, %c0_4] : memref<1x128xf32, #tpu.memory_space<vmem>>, vector<1x128xf32>
    %4 = vector.broadcast %3 : vector<1x128xf32> to vector<2x128xf32>
    %5 = arith.addf %2, %4 : vector<2x128xf32>
    %cst_5 = arith.constant 0.000000e+00 : f32
    %6 = vector.broadcast %cst_5 : f32 to vector<2x128xf32>
    %7 = arith.maximumf %5, %6 : vector<2x128xf32>
    %c0_6 = arith.constant 0 : index
    %c0_7 = arith.constant 0 : index
    %8 = vector.load %arg4[%c0_6, %c0_7] : memref<8x128xf32, #tpu.memory_space<vmem>>, vector<8x128xf32>
    %cst_8 = arith.constant dense<0.000000e+00> : vector<8x2xf32>
    %9 = tpu.matmul %8, %7, %cst_8 {dimension_numbers = #tpu.dot_dimension_numbers<[1], [1], [0], [0], [0, 0, 1, 0], [], []>} : vector<8x128xf32>, vector<2x128xf32>, vector<8x2xf32> -> vector<8x2xf32>
    %c0_9 = arith.constant 0 : index
    %c0_10 = arith.constant 0 : index
    %10 = vector.load %arg5[%c0_9, %c0_10] : memref<8x1xf32, #tpu.memory_space<vmem>>, vector<8x1xf32>
    %11 = vector.broadcast %10 : vector<8x1xf32> to vector<8x2xf32>
    %12 = arith.addf %9, %11 : vector<8x2xf32>
    %13 = math.tanh %12 : vector<8x2xf32>
    %14 = vector.extract_strided_slice %13 {offsets = [0, 0], sizes = [3, 2], strides = [1, 1]} : vector<8x2xf32> to vector<3x2xf32>
    %c0_11 = arith.constant 0 : index
    %c0_12 = arith.constant 0 : index
    %15 = vector.load %arg6[%c0_11, %c0_12] : memref<3x2xf32, #tpu.memory_space<vmem>>, vector<3x2xf32>
    tpu.vector_store %arg6[%c0_11, %c0_12], %14 {strides = array<i32>} : memref<3x2xf32, #tpu.memory_space<vmem>>, vector<3x2xf32>,
    return
  }
  func.func @transform_0(%arg0: i32) -> (i32, i32) {
    %c0_i32 = arith.constant 0 : i32
    %c0_i32_0 = arith.constant 0 : i32
    return %arg0, %c0_i32 : i32, i32
  }
  func.func @transform_1(%arg0: i32) -> (i32, i32) {
    %c0_i32 = arith.constant 0 : i32
    %c0_i32_0 = arith.constant 0 : i32
    %c0_i32_1 = arith.constant 0 : i32
    return %c0_i32, %c0_i32_0 : i32, i32
  }
  func.func @transform_2(%arg0: i32) -> (i32, i32) {
    %c0_i32 = arith.constant 0 : i32
    %c0_i32_0 = arith.constant 0 : i32
    %c0_i32_1 = arith.constant 0 : i32
    return %c0_i32, %c0_i32_0 : i32, i32
  }
  func.func @transform_3(%arg0: i32) -> (i32, i32) {
    %c0_i32 = arith.constant 0 : i32
    %c0_i32_0 = arith.constant 0 : i32
    %c0_i32_1 = arith.constant 0 : i32
    return %c0_i32, %c0_i32_0 : i32, i32
  }
  func.func @transform_4(%arg0: i32) -> (i32, i32) {
    %c0_i32 = arith.constant 0 : i32
    %c0_i32_0 = arith.constant 0 : i32
    %c0_i32_1 = arith.constant 0 : i32
    return %c0_i32, %c0_i32_0 : i32, i32
  }
  func.func @transform_5(%arg0: i32) -> (i32, i32) {
    %c0_i32 = arith.constant 0 : i32
    %c0_i32_0 = arith.constant 0 : i32
    return %c0_i32, %arg0 : i32, i32
  }
}

</mosaic_0001>

<llo_original>
// kernel: tpu_custom_call.1
$region0: #{tpu_custom_call.1}
  #allocation0 [shape = 'u32[]', space=smem, size = 0x4, offset = 0x4, fixed_abs, tag = 'smem constant byte address 0x4 - core index']
  #allocation1 [shape = 'u32[72,128]{1,0:T(1,128)}', space=vmem, size = 0x9000, scoped, tag = 'internal scratch']
  %s0 = inlined_call_operand.vmem [shape: bf16[2,1024], index: 0, kind: input, shape index: {}]
  %s1 = inlined_call_operand.hbm [shape: bf16[1024,128], index: 1, kind: input, shape index: {}]
  %s2 = inlined_call_operand.vmem [shape: f32[1,128], index: 2, kind: input, shape index: {}]
  %s3 = inlined_call_operand.hbm [shape: f32[8,128], index: 3, kind: input, shape index: {}]
  %s4 = inlined_call_operand.vmem [shape: f32[8,1], index: 4, kind: input, shape index: {}]
  %s5 = inlined_call_operand.vmem [shape: f32[3,2], index: 5, kind: output, shape index: {}]
  %s6 = sld [smem:[#allocation0]]
  $region38: #{tpu_custom_call.1} parent=0
    _
  %s8 = ssub.s32 1, %s6
  %s9 = scalar_select 0, %s8, %s6
  $region1: #{tpu_custom_call.1} parent=0
    #allocation2 [shape = 'u8[262144]{0}', space=vmem, size = 0x40000, scoped, tag = 'input window, operand 1, single buffered']
    #allocation3 [shape = 's32[1]{0}', space=sflag, size = 0x4, scoped, tag = 'scoped memory for tpu_custom_call.1']
    #allocation4 [shape = 'u8[4096]{0}', space=vmem, size = 0x1000, scoped, tag = 'input window, operand 3, single buffered']
    #allocation5 [shape = 's32[1]{0}', space=sflag, size = 0x4, scoped, tag = 'scoped memory for tpu_custom_call.1']
    %10 = vsyncpa [#allocation3], 0
    %11 = vsyncpa [#allocation5], 0
    // Predicated region
    $region2: #{tpu_custom_call.1} parent=1 // pred_check
      _
    $region3: #{tpu_custom_call.1} parent=1 // pred_check_branch
      %13 = sbr.rel (0) target = $region5
    $region4: #{tpu_custom_call.1} parent=1 // pred_region
      _
    $region5: #{tpu_custom_call.1} parent=1 // pred_fallthru
      _
    // Predicated region
    $region6: #{tpu_custom_call.1} parent=1 // pred_check
      _
    $region7: #{tpu_custom_call.1} parent=1 // pred_check_branch
      %15 = sbr.rel (0) target = $region9
    $region8: #{tpu_custom_call.1} parent=1 // pred_region
      %17 = vsyncadd [#allocation3], 0
      %s18 = sshll.u32 %s1, 4
      %s19 = int_to_ptr.hbm [resolvable:$true] %s18
      %s20 = sshll.u32 [#allocation2], 4
      %s21 = int_to_ptr.vmem [resolvable:$true] %s20
      %26 = dma.hbm_to_vmem [thread:$0]  %s19, 8192, %s21, [#allocation3], 64, 64, 4
    $region9: #{tpu_custom_call.1} parent=1 // pred_fallthru
      _
    // Predicated region
    $region10: #{tpu_custom_call.1} parent=1 // pred_check
      _
    $region11: #{tpu_custom_call.1} parent=1 // pred_check_branch
      %28 = sbr.rel (0) target = $region13
    $region12: #{tpu_custom_call.1} parent=1 // pred_region
      _
    $region13: #{tpu_custom_call.1} parent=1 // pred_fallthru
      _
    // Predicated region
    $region14: #{tpu_custom_call.1} parent=1 // pred_check
      _
    $region15: #{tpu_custom_call.1} parent=1 // pred_check_branch
      %30 = sbr.rel (0) target = $region17
    $region16: #{tpu_custom_call.1} parent=1 // pred_region
      %32 = vsyncadd [#allocation5], 0
      %s34 = sshll.u32 %s3, 4
      %s35 = int_to_ptr.hbm [resolvable:$true] %s34
      %s36 = sshll.u32 [#allocation4], 4
      %s37 = int_to_ptr.vmem [resolvable:$true] %s36
      %39 = dma.hbm_to_vmem [thread:$0]  %s35, 128, %s37, [#allocation5]
    $region17: #{tpu_custom_call.1} parent=1 // pred_fallthru
      _
    // Predicated region
    $region18: #{tpu_custom_call.1} parent=1 // pred_check
      _
    $region19: #{tpu_custom_call.1} parent=1 // pred_check_branch
      %41 = sbr.rel (0) target = $region21
    $region20: #{tpu_custom_call.1} parent=1 // pred_region
      _
    $region21: #{tpu_custom_call.1} parent=1 // pred_fallthru
      _
    // Predicated region
    $region22: #{tpu_custom_call.1} parent=1 // pred_check
      _
    $region23: #{tpu_custom_call.1} parent=1 // pred_check_branch
      %43 = sbr.rel (0) target = $region25
    $region24: #{tpu_custom_call.1} parent=1 // pred_region
      %45 = dma.done [#allocation3], 8192
    $region25: #{tpu_custom_call.1} parent=1 // pred_fallthru
      _
    // Predicated region
    $region26: #{tpu_custom_call.1} parent=1 // pred_check
      _
    $region27: #{tpu_custom_call.1} parent=1 // pred_check_branch
      %47 = sbr.rel (0) target = $region29
    $region28: #{tpu_custom_call.1} parent=1 // pred_region
      %49 = dma.done [#allocation5], 128
    $region29: #{tpu_custom_call.1} parent=1 // pred_fallthru
      _
    %v50 = vld [vmem:[%s0] sm:$0xff]
    %v51 = vld [vmem:[#allocation2] sm:$0xf]
    %v52 = vld [vmem:[#allocation2 + $0x4] sm:$0xf]
    %v53 = vld [vmem:[#allocation2 + $0x8] sm:$0xf]
    %v54 = vld [vmem:[#allocation2 + $0xc] sm:$0xf]
    %v55 = vld [vmem:[#allocation2 + $0x10] sm:$0xf]
    %v56 = vld [vmem:[#allocation2 + $0x14] sm:$0xf]
    %v57 = vld [vmem:[#allocation2 + $0x18] sm:$0xf]
    %v58 = vld [vmem:[#allocation2 + $0x1c] sm:$0xf]
    %v59 = vld [vmem:[#allocation2 + $0x20] sm:$0xf]
    %v60 = vld [vmem:[#allocation2 + $0x24] sm:$0xf]
    %v61 = vld [vmem:[#allocation2 + $0x28] sm:$0xf]
    %v62 = vld [vmem:[#allocation2 + $0x2c] sm:$0xf]
    %v63 = vld [vmem:[#allocation2 + $0x30] sm:$0xf]
    %v64 = vld [vmem:[#allocation2 + $0x34] sm:$0xf]
    %v65 = vld [vmem:[#allocation2 + $0x38] sm:$0xf]
    %v66 = vld [vmem:[#allocation2 + $0x3c] sm:$0xf]
    %v67 = vld [vmem:[#allocation2 + $0x40] sm:$0xf]
    %v68 = vld [vmem:[#allocation2 + $0x44] sm:$0xf]
    %v69 = vld [vmem:[#allocation2 + $0x48] sm:$0xf]
    %v70 = vld [vmem:[#allocation2 + $0x4c] sm:$0xf]
    %v71 = vld [vmem:[#allocation2 + $0x50] sm:$0xf]
    %v72 = vld [vmem:[#allocation2 + $0x54] sm:$0xf]
    %v73 = vld [vmem:[#allocation2 + $0x58] sm:$0xf]
    %v74 = vld [vmem:[#allocation2 + $0x5c] sm:$0xf]
    %v75 = vld [vmem:[#allocation2 + $0x60] sm:$0xf]
    %v76 = vld [vmem:[#allocation2 + $0x64] sm:$0xf]
    %v77 = vld [vmem:[#allocation2 + $0x68] sm:$0xf]
    %v78 = vld [vmem:[#allocation2 + $0x6c] sm:$0xf]
    %v79 = vld [vmem:[#allocation2 + $0x70] sm:$0xf]
    %v80 = vld [vmem:[#allocation2 + $0x74] sm:$0xf]
    %v81 = vld [vmem:[#allocation2 + $0x78] sm:$0xf]
    %v82 = vld [vmem:[#allocation2 + $0x7c] sm:$0xf]
    %v83 = vld [vmem:[#allocation2 + $0x80] sm:$0xf]
    %v84 = vld [vmem:[#allocation2 + $0x84] sm:$0xf]
    %v85 = vld [vmem:[#allocation2 + $0x88] sm:$0xf]
    %v86 = vld [vmem:[#allocation2 + $0x8c] sm:$0xf]
    %v87 = vld [vmem:[#allocation2 + $0x90] sm:$0xf]
    %v88 = vld [vmem:[#allocation2 + $0x94] sm:$0xf]
    %v89 = vld [vmem:[#allocation2 + $0x98] sm:$0xf]
    %v90 = vld [vmem:[#allocation2 + $0x9c] sm:$0xf]
    %v91 = vld [vmem:[#allocation2 + $0xa0] sm:$0xf]
    %v92 = vld [vmem:[#allocation2 + $0xa4] sm:$0xf]
    %v93 = vld [vmem:[#allocation2 + $0xa8] sm:$0xf]
    %v94 = vld [vmem:[#allocation2 + $0xac] sm:$0xf]
    %v95 = vld [vmem:[#allocation2 + $0xb0] sm:$0xf]
    %v96 = vld [vmem:[#allocation2 + $0xb4] sm:$0xf]
    %v97 = vld [vmem:[#allocation2 + $0xb8] sm:$0xf]
    %v98 = vld [vmem:[#allocation2 + $0xbc] sm:$0xf]
    %v99 = vld [vmem:[#allocation2 + $0xc0] sm:$0xf]
    %v100 = vld [vmem:[#allocation2 + $0xc4] sm:$0xf]
    %v101 = vld [vmem:[#allocation2 + $0xc8] sm:$0xf]
    %v102 = vld [vmem:[#allocation2 + $0xcc] sm:$0xf]
    %v103 = vld [vmem:[#allocation2 + $0xd0] sm:$0xf]
    %v104 = vld [vmem:[#allocation2 + $0xd4] sm:$0xf]
    %v105 = vld [vmem:[#allocation2 + $0xd8] sm:$0xf]
    %v106 = vld [vmem:[#allocation2 + $0xdc] sm:$0xf]
    %v107 = vld [vmem:[#allocation2 + $0xe0] sm:$0xf]
    %v108 = vld [vmem:[#allocation2 + $0xe4] sm:$0xf]
    %v109 = vld [vmem:[#allocation2 + $0xe8] sm:$0xf]
    %v110 = vld [vmem:[#allocation2 + $0xec] sm:$0xf]
    %v111 = vld [vmem:[#allocation2 + $0xf0] sm:$0xf]
    %v112 = vld [vmem:[#allocation2 + $0xf4] sm:$0xf]
    %v113 = vld [vmem:[#allocation2 + $0xf8] sm:$0xf]
    %v114 = vld [vmem:[#allocation2 + $0xfc] sm:$0xf]
    %v115 = vld [vmem:[#allocation2 + $0x100] sm:$0xf]
    %v116 = vld [vmem:[#allocation2 + $0x104] sm:$0xf]
    %v117 = vld [vmem:[#allocation2 + $0x108] sm:$0xf]
    %v118 = vld [vmem:[#allocation2 + $0x10c] sm:$0xf]
    %v119 = vld [vmem:[#allocation2 + $0x110] sm:$0xf]
    %v120 = vld [vmem:[#allocation2 + $0x114] sm:$0xf]
    %v121 = vld [vmem:[#allocation2 + $0x118] sm:$0xf]
    %v122 = vld [vmem:[#allocation2 + $0x11c] sm:$0xf]
    %v123 = vld [vmem:[#allocation2 + $0x120] sm:$0xf]
    %v124 = vld [vmem:[#allocation2 + $0x124] sm:$0xf]
    %v125 = vld [vmem:[#allocation2 + $0x128] sm:$0xf]
    %v126 = vld [vmem:[#allocation2 + $0x12c] sm:$0xf]
    %v127 = vld [vmem:[#allocation2 + $0x130] sm:$0xf]
    %v128 = vld [vmem:[#allocation2 + $0x134] sm:$0xf]
    %v129 = vld [vmem:[#allocation2 + $0x138] sm:$0xf]
    %v130 = vld [vmem:[#allocation2 + $0x13c] sm:$0xf]
    %v131 = vld [vmem:[#allocation2 + $0x140] sm:$0xf]
    %v132 = vld [vmem:[#allocation2 + $0x144] sm:$0xf]
    %v133 = vld [vmem:[#allocation2 + $0x148] sm:$0xf]
    %v134 = vld [vmem:[#allocation2 + $0x14c] sm:$0xf]
    %v135 = vld [vmem:[#allocation2 + $0x150] sm:$0xf]
    %v136 = vld [vmem:[#allocation2 + $0x154] sm:$0xf]
    %v137 = vld [vmem:[#allocation2 + $0x158] sm:$0xf]
    %v138 = vld [vmem:[#allocation2 + $0x15c] sm:$0xf]
    %v139 = vld [vmem:[#allocation2 + $0x160] sm:$0xf]
    %v140 = vld [vmem:[#allocation2 + $0x164] sm:$0xf]
    %v141 = vld [vmem:[#allocation2 + $0x168] sm:$0xf]
    %v142 = vld [vmem:[#allocation2 + $0x16c] sm:$0xf]
    %v143 = vld [vmem:[#allocation2 + $0x170] sm:$0xf]
    %v144 = vld [vmem:[#allocation2 + $0x174] sm:$0xf]
    %v145 = vld [vmem:[#allocation2 + $0x178] sm:$0xf]
    %v146 = vld [vmem:[#allocation2 + $0x17c] sm:$0xf]
    %v147 = vld [vmem:[#allocation2 + $0x180] sm:$0xf]
    %v148 = vld [vmem:[#allocation2 + $0x184] sm:$0xf]
    %v149 = vld [vmem:[#allocation2 + $0x188] sm:$0xf]
    %v150 = vld [vmem:[#allocation2 + $0x18c] sm:$0xf]
    %v151 = vld [vmem:[#allocation2 + $0x190] sm:$0xf]
    %v152 = vld [vmem:[#allocation2 + $0x194] sm:$0xf]
    %v153 = vld [vmem:[#allocation2 + $0x198] sm:$0xf]
    %v154 = vld [vmem:[#allocation2 + $0x19c] sm:$0xf]
    %v155 = vld [vmem:[#allocation2 + $0x1a0] sm:$0xf]
    %v156 = vld [vmem:[#allocation2 + $0x1a4] sm:$0xf]
    %v157 = vld [vmem:[#allocation2 + $0x1a8] sm:$0xf]
    %v158 = vld [vmem:[#allocation2 + $0x1ac] sm:$0xf]
    %v159 = vld [vmem:[#allocation2 + $0x1b0] sm:$0xf]
    %v160 = vld [vmem:[#allocation2 + $0x1b4] sm:$0xf]
    %v161 = vld [vmem:[#allocation2 + $0x1b8] sm:$0xf]
    %v162 = vld [vmem:[#allocation2 + $0x1bc] sm:$0xf]
    %v163 = vld [vmem:[#allocation2 + $0x1c0] sm:$0xf]
    %v164 = vld [vmem:[#allocation2 + $0x1c4] sm:$0xf]
    %v165 = vld [vmem:[#allocation2 + $0x1c8] sm:$0xf]
    %v166 = vld [vmem:[#allocation2 + $0x1cc] sm:$0xf]
    %v167 = vld [vmem:[#allocation2 + $0x1d0] sm:$0xf]
    %v168 = vld [vmem:[#allocation2 + $0x1d4] sm:$0xf]
    %v169 = vld [vmem:[#allocation2 + $0x1d8] sm:$0xf]
    %v170 = vld [vmem:[#allocation2 + $0x1dc] sm:$0xf]
    %v171 = vld [vmem:[#allocation2 + $0x1e0] sm:$0xf]
    %v172 = vld [vmem:[#allocation2 + $0x1e4] sm:$0xf]
    %v173 = vld [vmem:[#allocation2 + $0x1e8] sm:$0xf]
    %v174 = vld [vmem:[#allocation2 + $0x1ec] sm:$0xf]
    %v175 = vld [vmem:[#allocation2 + $0x1f0] sm:$0xf]
    %v176 = vld [vmem:[#allocation2 + $0x1f4] sm:$0xf]
    %v177 = vld [vmem:[#allocation2 + $0x1f8] sm:$0xf]
    %v178 = vld [vmem:[#allocation2 + $0x1fc] sm:$0xf]
    %v179 = vld [vmem:[%s2] sm:$0x1]
    %v181 = vperm.slane %v179, 0
    %184 = vst [vmem:[#allocation1] ss:$9 sm:$0xff] %v50
    %v185 = vld [vmem:[#allocation1] sm:$0xff]
    %v186 = vld [vmem:[#allocation1 + $0x9] sm:$0xff]
    %v187 = vld [vmem:[#allocation1 + $0x12] sm:$0xff]
    %v188 = vld [vmem:[#allocation1 + $0x1b] sm:$0xff]
    %v189 = vld [vmem:[#allocation1 + $0x24] sm:$0xff]
    %v190 = vld [vmem:[#allocation1 + $0x2d] sm:$0xff]
    %v191 = vld [vmem:[#allocation1 + $0x36] sm:$0xff]
    %v192 = vld [vmem:[#allocation1 + $0x3f] sm:$0xff]
    %v329 = vunpack.c.l.b16 %v51
    %v330 = vunpack.c.l.b16 %v52
    %v331 = vunpack.c.l.b16 %v53
    %v332 = vunpack.c.l.b16 %v54
    %v333 = vunpack.c.l.b16 %v55
    %v334 = vunpack.c.l.b16 %v56
    %v335 = vunpack.c.l.b16 %v57
    %v336 = vunpack.c.l.b16 %v58
    %v337 = vunpack.c.l.b16 %v59
    %v338 = vunpack.c.l.b16 %v60
    %v339 = vunpack.c.l.b16 %v61
    %v340 = vunpack.c.l.b16 %v62
    %v341 = vunpack.c.l.b16 %v63
    %v342 = vunpack.c.l.b16 %v64
    %v343 = vunpack.c.l.b16 %v65
    %v344 = vunpack.c.l.b16 %v66
    %v345 = vunpack.c.l.b16 %v67
    %v346 = vunpack.c.l.b16 %v68
    %v347 = vunpack.c.l.b16 %v69
    %v348 = vunpack.c.l.b16 %v70
    %v349 = vunpack.c.l.b16 %v71
    %v350 = vunpack.c.l.b16 %v72
    %v351 = vunpack.c.l.b16 %v73
    %v352 = vunpack.c.l.b16 %v74
    %v353 = vunpack.c.l.b16 %v75
    %v354 = vunpack.c.l.b16 %v76
    %v355 = vunpack.c.l.b16 %v77
    %v356 = vunpack.c.l.b16 %v78
    %v357 = vunpack.c.l.b16 %v79
    %v358 = vunpack.c.l.b16 %v80
    %v359 = vunpack.c.l.b16 %v81
    %v360 = vunpack.c.l.b16 %v82
    %v361 = vunpack.c.l.b16 %v83
    %v362 = vunpack.c.l.b16 %v84
    %v363 = vunpack.c.l.b16 %v85
    %v364 = vunpack.c.l.b16 %v86
    %v365 = vunpack.c.l.b16 %v87
    %v366 = vunpack.c.l.b16 %v88
    %v367 = vunpack.c.l.b16 %v89
    %v368 = vunpack.c.l.b16 %v90
    %v369 = vunpack.c.l.b16 %v91
    %v370 = vunpack.c.l.b16 %v92
    %v371 = vunpack.c.l.b16 %v93
    %v372 = vunpack.c.l.b16 %v94
    %v373 = vunpack.c.l.b16 %v95
    %v374 = vunpack.c.l.b16 %v96
    %v375 = vunpack.c.l.b16 %v97
    %v376 = vunpack.c.l.b16 %v98
    %v377 = vunpack.c.l.b16 %v99
    %v378 = vunpack.c.l.b16 %v100
    %v379 = vunpack.c.l.b16 %v101
    %v380 = vunpack.c.l.b16 %v102
    %v381 = vunpack.c.l.b16 %v103
    %v382 = vunpack.c.l.b16 %v104
    %v383 = vunpack.c.l.b16 %v105
    %v384 = vunpack.c.l.b16 %v106
    %v385 = vunpack.c.l.b16 %v107
    %v386 = vunpack.c.l.b16 %v108
    %v387 = vunpack.c.l.b16 %v109
    %v388 = vunpack.c.l.b16 %v110
    %v389 = vunpack.c.l.b16 %v111
    %v390 = vunpack.c.l.b16 %v112
    %v391 = vunpack.c.l.b16 %v113
    %v392 = vunpack.c.l.b16 %v114
    %v393 = vunpack.c.l.b16 %v115
    %v394 = vunpack.c.l.b16 %v116
    %v395 = vunpack.c.l.b16 %v117
    %v396 = vunpack.c.l.b16 %v118
    %v397 = vunpack.c.l.b16 %v119
    %v398 = vunpack.c.l.b16 %v120
    %v399 = vunpack.c.l.b16 %v121
    %v400 = vunpack.c.l.b16 %v122
    %v401 = vunpack.c.l.b16 %v123
    %v402 = vunpack.c.l.b16 %v124
    %v403 = vunpack.c.l.b16 %v125
    %v404 = vunpack.c.l.b16 %v126
    %v405 = vunpack.c.l.b16 %v127
    %v406 = vunpack.c.l.b16 %v128
    %v407 = vunpack.c.l.b16 %v129
    %v408 = vunpack.c.l.b16 %v130
    %v409 = vunpack.c.l.b16 %v131
    %v410 = vunpack.c.l.b16 %v132
    %v411 = vunpack.c.l.b16 %v133
    %v412 = vunpack.c.l.b16 %v134
    %v413 = vunpack.c.l.b16 %v135
    %v414 = vunpack.c.l.b16 %v136
    %v415 = vunpack.c.l.b16 %v137
    %v416 = vunpack.c.l.b16 %v138
    %v417 = vunpack.c.l.b16 %v139
    %v418 = vunpack.c.l.b16 %v140
    %v419 = vunpack.c.l.b16 %v141
    %v420 = vunpack.c.l.b16 %v142
    %v421 = vunpack.c.l.b16 %v143
    %v422 = vunpack.c.l.b16 %v144
    %v423 = vunpack.c.l.b16 %v145
    %v424 = vunpack.c.l.b16 %v146
    %v425 = vunpack.c.l.b16 %v147
    %v426 = vunpack.c.l.b16 %v148
    %v427 = vunpack.c.l.b16 %v149
    %v428 = vunpack.c.l.b16 %v150
    %v429 = vunpack.c.l.b16 %v151
    %v430 = vunpack.c.l.b16 %v152
    %v431 = vunpack.c.l.b16 %v153
    %v432 = vunpack.c.l.b16 %v154
    %v433 = vunpack.c.l.b16 %v155
    %v434 = vunpack.c.l.b16 %v156
    %v435 = vunpack.c.l.b16 %v157
    %v436 = vunpack.c.l.b16 %v158
    %v437 = vunpack.c.l.b16 %v159
    %v438 = vunpack.c.l.b16 %v160
    %v439 = vunpack.c.l.b16 %v161
    %v440 = vunpack.c.l.b16 %v162
    %v441 = vunpack.c.l.b16 %v163
    %v442 = vunpack.c.l.b16 %v164
    %v443 = vunpack.c.l.b16 %v165
    %v444 = vunpack.c.l.b16 %v166
    %v445 = vunpack.c.l.b16 %v167
    %v446 = vunpack.c.l.b16 %v168
    %v447 = vunpack.c.l.b16 %v169
    %v448 = vunpack.c.l.b16 %v170
    %v449 = vunpack.c.l.b16 %v171
    %v450 = vunpack.c.l.b16 %v172
    %v451 = vunpack.c.l.b16 %v173
    %v452 = vunpack.c.l.b16 %v174
    %v453 = vunpack.c.l.b16 %v175
    %v454 = vunpack.c.l.b16 %v176
    %v455 = vunpack.c.l.b16 %v177
    %v456 = vunpack.c.l.b16 %v178
    %v457 = vpack.c.b16 %v330, %v329
    %v458 = vpack.c.b16 %v332, %v331
    %v459 = vpack.c.b16 %v334, %v333
    %v460 = vpack.c.b16 %v336, %v335
    %v461 = vpack.c.b16 %v338, %v337
    %v462 = vpack.c.b16 %v340, %v339
    %v463 = vpack.c.b16 %v342, %v341
    %v464 = vpack.c.b16 %v344, %v343
    %v465 = vpack.c.b16 %v346, %v345
    %v466 = vpack.c.b16 %v348, %v347
    %v467 = vpack.c.b16 %v350, %v349
    %v468 = vpack.c.b16 %v352, %v351
    %v469 = vpack.c.b16 %v354, %v353
    %v470 = vpack.c.b16 %v356, %v355
    %v471 = vpack.c.b16 %v358, %v357
    %v472 = vpack.c.b16 %v360, %v359
    %v473 = vpack.c.b16 %v362, %v361
    %v474 = vpack.c.b16 %v364, %v363
    %v475 = vpack.c.b16 %v366, %v365
    %v476 = vpack.c.b16 %v368, %v367
    %v477 = vpack.c.b16 %v370, %v369
    %v478 = vpack.c.b16 %v372, %v371
    %v479 = vpack.c.b16 %v374, %v373
    %v480 = vpack.c.b16 %v376, %v375
    %v481 = vpack.c.b16 %v378, %v377
    %v482 = vpack.c.b16 %v380, %v379
    %v483 = vpack.c.b16 %v382, %v381
    %v484 = vpack.c.b16 %v384, %v383
    %v485 = vpack.c.b16 %v386, %v385
    %v486 = vpack.c.b16 %v388, %v387
    %v487 = vpack.c.b16 %v390, %v389
    %v488 = vpack.c.b16 %v392, %v391
    %v489 = vpack.c.b16 %v394, %v393
    %v490 = vpack.c.b16 %v396, %v395
    %v491 = vpack.c.b16 %v398, %v397
    %v492 = vpack.c.b16 %v400, %v399
    %v493 = vpack.c.b16 %v402, %v401
    %v494 = vpack.c.b16 %v404, %v403
    %v495 = vpack.c.b16 %v406, %v405
    %v496 = vpack.c.b16 %v408, %v407
    %v497 = vpack.c.b16 %v410, %v409
    %v498 = vpack.c.b16 %v412, %v411
    %v499 = vpack.c.b16 %v414, %v413
    %v500 = vpack.c.b16 %v416, %v415
    %v501 = vpack.c.b16 %v418, %v417
    %v502 = vpack.c.b16 %v420, %v419
    %v503 = vpack.c.b16 %v422, %v421
    %v504 = vpack.c.b16 %v424, %v423
    %v505 = vpack.c.b16 %v426, %v425
    %v506 = vpack.c.b16 %v428, %v427
    %v507 = vpack.c.b16 %v430, %v429
    %v508 = vpack.c.b16 %v432, %v431
    %v509 = vpack.c.b16 %v434, %v433
    %v510 = vpack.c.b16 %v436, %v435
    %v511 = vpack.c.b16 %v438, %v437
    %v512 = vpack.c.b16 %v440, %v439
    %v513 = vpack.c.b16 %v442, %v441
    %v514 = vpack.c.b16 %v444, %v443
    %v515 = vpack.c.b16 %v446, %v445
    %v516 = vpack.c.b16 %v448, %v447
    %v517 = vpack.c.b16 %v450, %v449
    %v518 = vpack.c.b16 %v452, %v451
    %v519 = vpack.c.b16 %v454, %v453
    %v520 = vpack.c.b16 %v456, %v455
    %585 = vmatpush.bf16.msra.mxu0 %v464
    %586 = vmatpush.bf16.msra.mxu0 %v463
    %587 = vmatpush.bf16.msra.mxu0 %v462
    %588 = vmatpush.bf16.msra.mxu0 %v461
    %589 = vmatpush.bf16.msra.mxu0 %v460
    %590 = vmatpush.bf16.msra.mxu0 %v459
    %591 = vmatpush.bf16.msra.mxu0 %v458
    %592 = vmatpush.bf16.msra.mxu0 %v457
    %593 = vmatmul.bf16.gmra.mxu0 %v185
    %v594 = vpop.f32.mrf.mxu0
    %v595 = vadd.f32 %v181, %v594
    %v596 = vpop.f32.mrf.mxu0
    %597 = vdwg.mxu0
    %598 = vmatpush.bf16.msra.mxu0 %v472
    %599 = vmatpush.bf16.msra.mxu0 %v471
    %600 = vmatpush.bf16.msra.mxu0 %v470
    %601 = vmatpush.bf16.msra.mxu0 %v469
    %602 = vmatpush.bf16.msra.mxu0 %v468
    %603 = vmatpush.bf16.msra.mxu0 %v467
    %604 = vmatpush.bf16.msra.mxu0 %v466
    %605 = vmatpush.bf16.msra.mxu0 %v465
    %606 = vmatmul.bf16.gmra.mxu0 %v186
    %v607 = vpop.f32.mrf.mxu0
    %v608 = vadd.f32 %v595, %v607
    %v609 = vpop.f32.mrf.mxu0
    %610 = vdwg.mxu0
    %611 = vmatpush.bf16.msra.mxu0 %v480
    %612 = vmatpush.bf16.msra.mxu0 %v479
    %613 = vmatpush.bf16.msra.mxu0 %v478
    %614 = vmatpush.bf16.msra.mxu0 %v477
    %615 = vmatpush.bf16.msra.mxu0 %v476
    %616 = vmatpush.bf16.msra.mxu0 %v475
    %617 = vmatpush.bf16.msra.mxu0 %v474
    %618 = vmatpush.bf16.msra.mxu0 %v473
    %619 = vmatmul.bf16.gmra.mxu0 %v187
    %v620 = vpop.f32.mrf.mxu0
    %v621 = vadd.f32 %v608, %v620
    %v622 = vpop.f32.mrf.mxu0
    %623 = vdwg.mxu0
    %624 = vmatpush.bf16.msra.mxu0 %v488
    %625 = vmatpush.bf16.msra.mxu0 %v487
    %626 = vmatpush.bf16.msra.mxu0 %v486
    %627 = vmatpush.bf16.msra.mxu0 %v485
    %628 = vmatpush.bf16.msra.mxu0 %v484
    %629 = vmatpush.bf16.msra.mxu0 %v483
    %630 = vmatpush.bf16.msra.mxu0 %v482
    %631 = vmatpush.bf16.msra.mxu0 %v481
    %632 = vmatmul.bf16.gmra.mxu0 %v188
    %v633 = vpop.f32.mrf.mxu0
    %v634 = vadd.f32 %v621, %v633
    %v635 = vpop.f32.mrf.mxu0
    %636 = vdwg.mxu0
    %637 = vmatpush.bf16.msra.mxu0 %v496
    %638 = vmatpush.bf16.msra.mxu0 %v495
    %639 = vmatpush.bf16.msra.mxu0 %v494
    %640 = vmatpush.bf16.msra.mxu0 %v493
    %641 = vmatpush.bf16.msra.mxu0 %v492
    %642 = vmatpush.bf16.msra.mxu0 %v491
    %643 = vmatpush.bf16.msra.mxu0 %v490
    %644 = vmatpush.bf16.msra.mxu0 %v489
    %645 = vmatmul.bf16.gmra.mxu0 %v189
    %v646 = vpop.f32.mrf.mxu0
    %v647 = vadd.f32 %v634, %v646
    %v648 = vpop.f32.mrf.mxu0
    %649 = vdwg.mxu0
    %650 = vmatpush.bf16.msra.mxu0 %v504
    %651 = vmatpush.bf16.msra.mxu0 %v503
    %652 = vmatpush.bf16.msra.mxu0 %v502
    %653 = vmatpush.bf16.msra.mxu0 %v501
    %654 = vmatpush.bf16.msra.mxu0 %v500
    %655 = vmatpush.bf16.msra.mxu0 %v499
    %656 = vmatpush.bf16.msra.mxu0 %v498
    %657 = vmatpush.bf16.msra.mxu0 %v497
    %658 = vmatmul.bf16.gmra.mxu0 %v190
    %v659 = vpop.f32.mrf.mxu0
    %v660 = vadd.f32 %v647, %v659
    %v661 = vpop.f32.mrf.mxu0
    %662 = vdwg.mxu0
    %663 = vmatpush.bf16.msra.mxu0 %v512
    %664 = vmatpush.bf16.msra.mxu0 %v511
    %665 = vmatpush.bf16.msra.mxu0 %v510
    %666 = vmatpush.bf16.msra.mxu0 %v509
    %667 = vmatpush.bf16.msra.mxu0 %v508
    %668 = vmatpush.bf16.msra.mxu0 %v507
    %669 = vmatpush.bf16.msra.mxu0 %v506
    %670 = vmatpush.bf16.msra.mxu0 %v505
    %671 = vmatmul.bf16.gmra.mxu0 %v191
    %v672 = vpop.f32.mrf.mxu0
    %v673 = vadd.f32 %v660, %v672
    %v674 = vpop.f32.mrf.mxu0
    %675 = vdwg.mxu0
    %676 = vmatpush.bf16.msra.mxu0 %v520
    %677 = vmatpush.bf16.msra.mxu0 %v519
    %678 = vmatpush.bf16.msra.mxu0 %v518
    %679 = vmatpush.bf16.msra.mxu0 %v517
    %680 = vmatpush.bf16.msra.mxu0 %v516
    %681 = vmatpush.bf16.msra.mxu0 %v515
    %682 = vmatpush.bf16.msra.mxu0 %v514
    %683 = vmatpush.bf16.msra.mxu0 %v513
    %684 = vmatmul.bf16.gmra.mxu0 %v192
    %v685 = vpop.f32.mrf.mxu0
    %v686 = vadd.f32 %v673, %v685
    %v687 = vpop.f32.mrf.mxu0
    %688 = vdwg.mxu0
    %v689 = vmax.f32 %v686, 0.0
    %v690 = vld [vmem:[#allocation4] sm:$0xff]
    %v691 = vld [vmem:[%s4] sm:$0xff]
    %693 = vset.pattern.permute.xlu0 0
    %694 = vperm.xlu0 %693, %v691
    %v695 = vpop.permute.xlu0 %694
    %697 = vmatpush.xpose.msra.mxu0 0.0
    %698 = vmatpush.xpose.msra.mxu0 0.0
    %699 = vmatpush.xpose.msra.mxu0 0.0
    %700 = vmatpush.xpose.msra.mxu0 0.0
    %701 = vmatpush.xpose.msra.mxu0 0.0
    %702 = vmatpush.xpose.msra.mxu0 0.0
    %703 = vmatpush.xpose.msra.mxu0 0.0
    %704 = vmatpush.xpose.msra.mxu0 0.0
    %705 = vmatpush.xpose.msra.mxu0 0.0
    %706 = vmatpush.xpose.msra.mxu0 0.0
    %707 = vmatpush.xpose.msra.mxu0 0.0
    %708 = vmatpush.xpose.msra.mxu0 0.0
    %709 = vmatpush.xpose.msra.mxu0 0.0
    %710 = vmatpush.xpose.msra.mxu0 0.0
    %711 = vmatpush.xpose.msra.mxu0 0.0
    %712 = vmatpush.xpose.msra.mxu0 %v689
    %713 = vmatmul.f32.gmra.mxu0 %v690
    %v714 = vpop.f32.mrf.mxu0
    %v715 = vadd.f32 %v695, %v714
    %716 = vdwg.mxu0
    %v717 = vtanh.pop %v715
    %vm718 = vcmask 10240
    %719 = vst.msk [vmem:[%s5] sm:$0x7] %vm718, %v717
    // Predicated region
    $region30: #{tpu_custom_call.1} parent=1 // pred_check
      _
    $region31: #{tpu_custom_call.1} parent=1 // pred_check_branch
      %721 = sbr.rel (0) target = $region33
    $region32: #{tpu_custom_call.1} parent=1 // pred_region
      _
    $region33: #{tpu_custom_call.1} parent=1 // pred_fallthru
      _
    // Predicated region
    $region34: #{tpu_custom_call.1} parent=1 // pred_check
      _
    $region35: #{tpu_custom_call.1} parent=1 // pred_check_branch
      %723 = sbr.rel (0) target = $region37
    $region36: #{tpu_custom_call.1} parent=1 // pred_region
      _
    $region37: #{tpu_custom_call.1} parent=1 // pred_fallthru
      _
    %724 = vsyncpa [#allocation3], 1
    %725 = vsyncpa [#allocation5], 1

</llo_original>
